<compile_context>
chip_gen: v6e
topology: v6e:2x2x1
jax: 0.10.0
libtpu: 0.0.40
codegen_flags: <defaults>
</compile_context>

<pallas_src>
import functools

import jax
import jax.numpy as jnp
from jax.experimental import pallas as pl
from jax.experimental.pallas import tpu as pltpu


def _soft_argmax_kernel(x_ref, g_ref, coords_ref, conf_ref, *, beta):
    # x_ref:      (1, TBC, N)  heatmaps for one plane / one BC tile (native dtype)
    # g_ref:      (1, N, 2)    grid coordinates for this plane (f32)
    # coords_ref: (1, TBC, 2)  soft-argmax coordinates
    # conf_ref:   (1, TBC, 1)  max softmax probability (confidence)
    x = x_ref[0].astype(jnp.float32) * beta                   # (TBC, N)
    m = jnp.max(x, axis=-1, keepdims=True)                    # row max (stable softmax)
    e = jnp.exp(x - m)                                        # unnormalized softmax
    s = jnp.sum(e, axis=-1, keepdims=True)                    # (TBC, 1)

    # max over N of softmax == exp(max - max) / sum == 1 / sum.
    # Exact reciprocal (tiny (TBC,1) op) so we stay within 1e-5 accuracy.
    inv_s = pl.reciprocal(s, approx=False)
    conf_ref[0] = inv_s

    # Deferred normalization: matmul on unnormalized e, scale the small result.
    raw = jnp.dot(e, g_ref[0], preferred_element_type=jnp.float32)   # (TBC, 2)
    coords_ref[0] = (raw * inv_s).astype(coords_ref.dtype)


def _choose_block_bc(BC, N, in_itemsize, vmem_budget_bytes=12 << 20):
    """Largest multiple-of-8 BC tile whose per-step working set fits the budget."""
    # Per BC-row VMEM cost: 2 double-buffered native-dtype input rows plus
    # ~3 f32-sized in-kernel temporaries (scaled logits, exp, ...).
    bytes_per_row = N * (2 * in_itemsize + 3 * 4)
    tbc = max(1, vmem_budget_bytes // bytes_per_row)
    if tbc >= BC:
        return BC
    return max(8, (tbc // 8) * 8)


def soft_argmax_pallas(x, grids, beta):
    """x: (3, B, C, H, W) in its native dtype; grids: anything reshapable to (3, N, 2)."""
    three, B, C, H, W = x.shape
    assert three == 3
    N = H * W
    BC = B * C

    x_flat = x.reshape(3, BC, N)                        # NO upcast: DMA native dtype
    g = grids.reshape(3, N, 2).astype(jnp.float32)

    tbc = _choose_block_bc(BC, N, x_flat.dtype.itemsize)
    n_bc_tiles = pl.cdiv(BC, tbc)

    kernel = functools.partial(_soft_argmax_kernel, beta=float(beta))

    coords, conf = pl.pallas_call(
        kernel,
        out_shape=(
            jax.ShapeDtypeStruct((3, BC, 2), jnp.float32),
            jax.ShapeDtypeStruct((3, BC, 1), jnp.float32),
        ),
        grid_spec=pltpu.PrefetchScalarGridSpec(
            num_scalar_prefetch=0,
            grid=(3, n_bc_tiles),                       # plane outer, BC-tile inner
            in_specs=[
                pl.BlockSpec((1, tbc, N), lambda p, b: (p, b, 0)),
                pl.BlockSpec((1, N, 2), lambda p, b: (p, 0, 0)),   # constant across b
            ],
            out_specs=[
                pl.BlockSpec((1, tbc, 2), lambda p, b: (p, b, 0)),
                pl.BlockSpec((1, tbc, 1), lambda p, b: (p, b, 0)),
            ],
        ),
        compiler_params=pltpu.CompilerParams(
            dimension_semantics=("parallel", "parallel"),
        ),
    )(x_flat, g)

    coords = coords.reshape(3, B, C, 2)
    # Tiny glue reduction: mean over (plane, channel) of per-heatmap confidences.
    confs = jnp.mean(conf.reshape(3, B, C), axis=(0, 2))   # (B,)
    return coords, confs


def soft_argmax_reference(x, grids, beta):
    """Pure-JAX transcription of the PyTorch forward, for verification."""
    B, C = x.shape[1], x.shape[2]
    xr = x.reshape(3, B, C, -1, 1)
    xs = jax.nn.softmax(beta * xr, axis=3)
    confs = jnp.max(xs, axis=3)                    # (3, B, C, 1)
    confs = jnp.mean(confs[..., 0], axis=(0, 2))   # (B,)
    g = grids.reshape(3, 1, 1, -1, 2)
    out = jnp.sum(xs * g, axis=3)                  # (3, B, C, 2)
    return out, confs


if __name__ == "__main__":
    # Deterministic parameter from cfg.NETWORK.BETA
    BETA = 100.0

    B, C, H, W = 2, 4, 16, 16
    N = H * W

    key = jax.random.PRNGKey(0)
    kx, kg = jax.random.split(key)
    x = jax.random.normal(kx, (3, B, C, H, W), dtype=jnp.float32)
    # grids: per-plane 2D coordinates for each of the N spatial locations
    grids = jax.random.uniform(kg, (3, N, 2), dtype=jnp.float32, minval=-1.0, maxval=1.0)

    # --- f32 heatmaps ---
    coords, confs = soft_argmax_pallas(x, grids, BETA)
    coords = jax.block_until_ready(coords)
    confs = jax.block_until_ready(confs)

    coords_ref, confs_ref = soft_argmax_reference(x, grids, BETA)
    assert coords.shape == (3, B, C, 2)
    assert confs.shape == (B,)
    assert jnp.allclose(coords, coords_ref, atol=1e-5, rtol=1e-5)
    assert jnp.allclose(confs, confs_ref, atol=1e-5, rtol=1e-5)

    # --- bf16 heatmaps: kernel DMAs native bf16 and up-casts in VMEM ---
    x_bf16 = x.astype(jnp.bfloat16)
    coords_b, confs_b = soft_argmax_pallas(x_bf16, grids, BETA)
    coords_b = jax.block_until_ready(coords_b)
    confs_b = jax.block_until_ready(confs_b)

    coords_ref_b, confs_ref_b = soft_argmax_reference(
        x_bf16.astype(jnp.float32), grids, BETA)
    assert jnp.allclose(coords_b, coords_ref_b, atol=1e-4, rtol=1e-4)
    assert jnp.allclose(confs_b, confs_ref_b, atol=1e-4, rtol=1e-4)

    print("KERNEL_OK")
</pallas_src>

<mosaic_0001>
module attributes {stable_mosaic.version = 11 : i64} {
  func.func @_soft_argmax_kernel(%arg0: i32, %arg1: i32, %arg2: memref<1x8x256xf32, #tpu.memory_space<vmem>>, %arg3: memref<1x256x2xf32, #tpu.memory_space<vmem>>, %arg4: memref<1x8x2xf32, #tpu.memory_space<vmem>>, %arg5: memref<1x8x1xf32, #tpu.memory_space<vmem>>) attributes {dimension_semantics = [#tpu.dimension_semantics<parallel>, #tpu.dimension_semantics<parallel>], iteration_bounds = array<i64: 3, 1>, scalar_prefetch = 0 : i64, scratch_operands = 0 : i64, tpu.core_type = #tpu.core_type<tc>, window_params = [{transform_indices = @transform_0, window_bounds = array<i64: 1, 8, 256>}, {transform_indices = @transform_1, window_bounds = array<i64: 1, 256, 2>}, {transform_indices = @transform_2, window_bounds = array<i64: 1, 8, 2>}, {transform_indices = @transform_3, window_bounds = array<i64: 1, 8, 1>}]} {
    %c0 = arith.constant 0 : index
    %c0_0 = arith.constant 0 : index
    %c0_1 = arith.constant 0 : index
    %0 = vector.load %arg2[%c0, %c0_0, %c0_1] : memref<1x8x256xf32, #tpu.memory_space<vmem>>, vector<1x8x256xf32>
    %1 = vector.shape_cast %0 : vector<1x8x256xf32> to vector<8x256xf32>
    %cst = arith.constant 1.000000e+02 : f32
    %2 = vector.broadcast %cst : f32 to vector<8x256xf32>
    %3 = arith.mulf %1, %2 : vector<8x256xf32>
    %cst_2 = arith.constant dense<0xFF800000> : vector<8xf32>
    %4 = vector.multi_reduction <maximumf>, %3, %cst_2 [1] : vector<8x256xf32> to vector<8xf32>
    %5 = vector.shape_cast %4 : vector<8xf32> to vector<8x1xf32>
    %6 = vector.broadcast %5 : vector<8x1xf32> to vector<8x256xf32>
    %7 = arith.subf %3, %6 : vector<8x256xf32>
    %8 = math.exp %7 : vector<8x256xf32>
    %cst_3 = arith.constant dense<0.000000e+00> : vector<8xf32>
    %9 = vector.multi_reduction <add>, %8, %cst_3 [1] : vector<8x256xf32> to vector<8xf32>
    %10 = vector.shape_cast %9 : vector<8xf32> to vector<8x1xf32>
    %11 = tpu.reciprocal %10 : vector<8x1xf32> -> vector<8x1xf32>
    %c0_4 = arith.constant 0 : index
    %c0_5 = arith.constant 0 : index
    %c0_6 = arith.constant 0 : index
    %12 = vector.load %arg5[%c0_4, %c0_5, %c0_6] : memref<1x8x1xf32, #tpu.memory_space<vmem>>, vector<1x8x1xf32>
    %13 = vector.shape_cast %12 : vector<1x8x1xf32> to vector<8x1xf32>
    %14 = vector.shape_cast %11 : vector<8x1xf32> to vector<1x8x1xf32>
    tpu.vector_store %arg5[%c0_4, %c0_5, %c0_6], %14 {strides = array<i32>} : memref<1x8x1xf32, #tpu.memory_space<vmem>>, vector<1x8x1xf32>,
    %c0_7 = arith.constant 0 : index
    %c0_8 = arith.constant 0 : index
    %c0_9 = arith.constant 0 : index
    %15 = vector.load %arg3[%c0_7, %c0_8, %c0_9] : memref<1x256x2xf32, #tpu.memory_space<vmem>>, vector<1x256x2xf32>
    %16 = vector.shape_cast %15 : vector<1x256x2xf32> to vector<256x2xf32>
    %cst_10 = arith.constant dense<0.000000e+00> : vector<8x2xf32>
    %17 = tpu.matmul %8, %16, %cst_10 {dimension_numbers = #tpu.dot_dimension_numbers<[1], [0], [0], [1], [0, 0, 1, 1], [], []>} : vector<8x256xf32>, vector<256x2xf32>, vector<8x2xf32> -> vector<8x2xf32>
    %18 = vector.broadcast %11 : vector<8x1xf32> to vector<8x2xf32>
    %19 = arith.mulf %17, %18 : vector<8x2xf32>
    %c0_11 = arith.constant 0 : index
    %c0_12 = arith.constant 0 : index
    %c0_13 = arith.constant 0 : index
    %20 = vector.load %arg4[%c0_11, %c0_12, %c0_13] : memref<1x8x2xf32, #tpu.memory_space<vmem>>, vector<1x8x2xf32>
    %21 = vector.shape_cast %20 : vector<1x8x2xf32> to vector<8x2xf32>
    %22 = vector.shape_cast %19 : vector<8x2xf32> to vector<1x8x2xf32>
    tpu.vector_store %arg4[%c0_11, %c0_12, %c0_13], %22 {strides = array<i32>} : memref<1x8x2xf32, #tpu.memory_space<vmem>>, vector<1x8x2xf32>,
    return
  }
  func.func @transform_0(%arg0: i32, %arg1: i32) -> (i32, i32, i32) {
    %c0_i32 = arith.constant 0 : i32
    %c0_i32_0 = arith.constant 0 : i32
    return %arg0, %arg1, %c0_i32 : i32, i32, i32
  }
  func.func @transform_1(%arg0: i32, %arg1: i32) -> (i32, i32, i32) {
    %c0_i32 = arith.constant 0 : i32
    %c0_i32_0 = arith.constant 0 : i32
    %c0_i32_1 = arith.constant 0 : i32
    return %arg0, %c0_i32, %c0_i32_0 : i32, i32, i32
  }
  func.func @transform_2(%arg0: i32, %arg1: i32) -> (i32, i32, i32) {
    %c0_i32 = arith.constant 0 : i32
    %c0_i32_0 = arith.constant 0 : i32
    return %arg0, %arg1, %c0_i32 : i32, i32, i32
  }
  func.func @transform_3(%arg0: i32, %arg1: i32) -> (i32, i32, i32) {
    %c0_i32 = arith.constant 0 : i32
    %c0_i32_0 = arith.constant 0 : i32
    return %arg0, %arg1, %c0_i32 : i32, i32, i32
  }
}

</mosaic_0001>

<llo_original>
// kernel: tpu_custom_call.1
$region0: #{tpu_custom_call.1}
  #allocation0 [shape = 'u32[]', space=smem, size = 0x4, offset = 0x4, fixed_abs, tag = 'smem constant byte address 0x4 - core index']
  #allocation1 [shape = 'u32[144,128]{1,0:T(1,128)}', space=vmem, size = 0x12000, scoped, tag = 'internal scratch']
  %s0 = inlined_call_operand.vmem [shape: f32[3,8,256], index: 0, kind: input, shape index: {}]
  %s1 = inlined_call_operand.vmem [shape: f32[3,256,2], index: 1, kind: input, shape index: {}]
  %s2 = inlined_call_operand.vmem [shape: f32[3,8,2], index: 2, kind: output, shape index: {0}]
  %s3 = inlined_call_operand.vmem [shape: f32[3,8,1], index: 3, kind: output, shape index: {1}]
  %4 = xla_tuple %s2, %s3
  %s5 = sld [smem:[#allocation0]]
  $region49: #{tpu_custom_call.1} parent=0
    _
  %s7 = ssub.s32 1, %s5
  %s8 = scalar_select 0, %s7, %s5
  loop: start=0, step=1, limit=5
  $region2: #{tpu_custom_call.1} parent=0 // loop_pre_header
    _
  $region3: #{tpu_custom_call.1} parent=0 // loop_header
    %s10 = sphi 0, %s14
    %p11 = scmp.ge.s32.totalorder %s10, 5
    %s17 = sphi 0, %s29
    %s18 = sphi 0, %s25
    %s19 = sphi 0, %s17
    %s20 = sphi 0, %s18
    %s21 = sphi 0, %s19
    %s22 = sphi 0, %s20
    %s34 = sphi 0, %s36
    %s37 = sphi 0, %s34
    %s38 = sphi 0, %s37
    %s54 = sphi 0, %s38
    %s60 = sphi 0, %s62
    %s63 = sphi 0, %s60
    %s64 = sphi 0, %s63
    %s80 = sphi 0, %s64
    %s88 = sphi 0, %s90
    %s91 = sphi 0, %s88
    %s92 = sphi 0, %s91
    %s108 = sphi 0, %s92
    %s116 = sphi 0, %s118
    %s119 = sphi 0, %s116
    %s120 = sphi 0, %s119
    %s136 = sphi 0, %s120
  $region4: #{tpu_custom_call.1} parent=0 // loop_header_branch
    %13 = sbr.rel (%p11) target = $region8
  $region5: #{tpu_custom_call.1} parent=0 // loop_body
    %s15 = ssub.s32 %s10, 1
    %s16 = ssub.s32 %s10, 2
    %s23 = sadd.s32 1, %s18
    %p24 = scmp.ge.s32.totalorder %s23, 1
    %s25 = scalar_select %p24, 0, %s23
    %s26 = sadd.s32 1, %s17
    %s27 = scalar_select %p24, %s26, %s17
    %p28 = scmp.ge.s32.totalorder %s27, 3
    %s29 = scalar_select %p28, 0, %s27
    %s30 = ssub.s32 %s17, %s29
    %s31 = ssub.s32 %s18, %s25
    %s32 = sor.u32 %s30, %s31
    %p33 = scmp.eq.s32.totalorder %s32, 0
    %s35 = sadd.s32 %s34, 1
    %s36 = scalar_select %p33, %s34, %s35
    %p39 = pneg %p33
    %p40 = scmp.eq.s32.totalorder %s10, 2
    %p41 = por %p39, %p40
    %p42 = scmp.ne.s32.totalorder %s34, %s37
    %p43 = scmp.eq.s32.totalorder %s10, 0
    %p44 = por %p42, %p43
    %p45 = scmp.ne.s32.totalorder %s34, %s37
    %p46 = scmp.eq.s32.totalorder %s15, 2
    %p47 = por %p45, %p46
    %p48 = scmp.ne.s32.totalorder %s37, %s38
    %p49 = scmp.eq.s32.totalorder %s15, 0
    %p50 = por %p48, %p49
    %p51 = scmp.ne.s32.totalorder %s37, %s38
    %p52 = scmp.eq.s32.totalorder %s16, 2
    %p53 = por %p51, %p52
    %p55 = scmp.ne.s32.totalorder %s38, %s54
    %p56 = scmp.eq.s32.totalorder %s16, 0
    %p57 = por %p55, %p56
    %s58 = ssub.s32 %s17, %s29
    %p59 = scmp.eq.s32.totalorder %s58, 0
    %s61 = sadd.s32 %s60, 1
    %s62 = scalar_select %p59, %s60, %s61
    %p65 = pneg %p59
    %p66 = scmp.eq.s32.totalorder %s10, 2
    %p67 = por %p65, %p66
    %p68 = scmp.ne.s32.totalorder %s60, %s63
    %p69 = scmp.eq.s32.totalorder %s10, 0
    %p70 = por %p68, %p69
    %p71 = scmp.ne.s32.totalorder %s60, %s63
    %p72 = scmp.eq.s32.totalorder %s15, 2
    %p73 = por %p71, %p72
    %p74 = scmp.ne.s32.totalorder %s63, %s64
    %p75 = scmp.eq.s32.totalorder %s15, 0
    %p76 = por %p74, %p75
    %p77 = scmp.ne.s32.totalorder %s63, %s64
    %p78 = scmp.eq.s32.totalorder %s16, 2
    %p79 = por %p77, %p78
    %p81 = scmp.ne.s32.totalorder %s64, %s80
    %p82 = scmp.eq.s32.totalorder %s16, 0
    %p83 = por %p81, %p82
    %s84 = ssub.s32 %s17, %s29
    %s85 = ssub.s32 %s18, %s25
    %s86 = sor.u32 %s84, %s85
    %p87 = scmp.eq.s32.totalorder %s86, 0
    %s89 = sadd.s32 %s88, 1
    %s90 = scalar_select %p87, %s88, %s89
    %p93 = pneg %p87
    %p94 = scmp.eq.s32.totalorder %s10, 2
    %p95 = por %p93, %p94
    %p96 = scmp.ne.s32.totalorder %s88, %s91
    %p97 = scmp.eq.s32.totalorder %s10, 0
    %p98 = por %p96, %p97
    %p99 = scmp.ne.s32.totalorder %s88, %s91
    %p100 = scmp.eq.s32.totalorder %s15, 2
    %p101 = por %p99, %p100
    %p102 = scmp.ne.s32.totalorder %s91, %s92
    %p103 = scmp.eq.s32.totalorder %s15, 0
    %p104 = por %p102, %p103
    %p105 = scmp.ne.s32.totalorder %s91, %s92
    %p106 = scmp.eq.s32.totalorder %s16, 2
    %p107 = por %p105, %p106
    %p109 = scmp.ne.s32.totalorder %s92, %s108
    %p110 = scmp.eq.s32.totalorder %s16, 0
    %p111 = por %p109, %p110
    %s112 = ssub.s32 %s17, %s29
    %s113 = ssub.s32 %s18, %s25
    %s114 = sor.u32 %s112, %s113
    %p115 = scmp.eq.s32.totalorder %s114, 0
    %s117 = sadd.s32 %s116, 1
    %s118 = scalar_select %p115, %s116, %s117
    %p121 = pneg %p115
    %p122 = scmp.eq.s32.totalorder %s10, 2
    %p123 = por %p121, %p122
    %p124 = scmp.ne.s32.totalorder %s116, %s119
    %p125 = scmp.eq.s32.totalorder %s10, 0
    %p126 = por %p124, %p125
    %p127 = scmp.ne.s32.totalorder %s116, %s119
    %p128 = scmp.eq.s32.totalorder %s15, 2
    %p129 = por %p127, %p128
    %p130 = scmp.ne.s32.totalorder %s119, %s120
    %p131 = scmp.eq.s32.totalorder %s15, 0
    %p132 = por %p130, %p131
    %p133 = scmp.ne.s32.totalorder %s119, %s120
    %p134 = scmp.eq.s32.totalorder %s16, 2
    %p135 = por %p133, %p134
    %p137 = scmp.ne.s32.totalorder %s120, %s136
    %p138 = scmp.eq.s32.totalorder %s16, 0
    %p139 = por %p137, %p138
    %p140 = scmp.le.s32.totalorder 1, %s10
    %p141 = scmp.lt.s32.totalorder %s10, 4
    %p142 = pnand %p140, %p141
    %p143 = pneg %p142
    // Predicated region
    $region9: #{tpu_custom_call.1} parent=5 // pred_check
      _
    $region10: #{tpu_custom_call.1} parent=5 // pred_check_branch
      %145 = sbr.rel (%p142) target = $region12
    $region11: #{tpu_custom_call.1} parent=5 // pred_region
      %s146 = ssub.s32 %s10, 1
    $region12: #{tpu_custom_call.1} parent=5 // pred_fallthru
      _
    %p147 = scmp.lt.s32.totalorder %s10, 3
    // Predicated region
    $region13: #{tpu_custom_call.1} parent=5 // pred_check
      %p148 = pneg %p147
    $region14: #{tpu_custom_call.1} parent=5 // pred_check_branch
      %150 = sbr.rel (%p148) target = $region16
    $region15: #{tpu_custom_call.1} parent=5 // pred_region
      // Predicated region
      $region17: #{tpu_custom_call.1} parent=15 // pred_check
        %p151 = pneg %p44
      $region18: #{tpu_custom_call.1} parent=15 // pred_check_branch
        %153 = sbr.rel (%p151) target = $region20
      $region19: #{tpu_custom_call.1} parent=15 // pred_region
        %p154 = scmp.lt.s32.totalorder %s17, 2
        %s155 = scalar_select %p154, %s17, 2
        %p156 = scmp.lt.s32.totalorder %s18, 0
        %s157 = scalar_select %p156, %s18, 0
        %s158 = smul.addr %s157, 2
        %s159 = smul.addr %s155, 2
        %s160 = sadd.s32 %s158, %s159
        %s161 = smul.addr %s160, 8
        %s162 = scalar_lea.vmem %s0, %s161
      $region20: #{tpu_custom_call.1} parent=15 // pred_fallthru
        _
      // Predicated region
      $region21: #{tpu_custom_call.1} parent=15 // pred_check
        %p163 = pneg %p70
      $region22: #{tpu_custom_call.1} parent=15 // pred_check_branch
        %165 = sbr.rel (%p163) target = $region24
      $region23: #{tpu_custom_call.1} parent=15 // pred_region
        %p166 = scmp.lt.s32.totalorder %s17, 2
        %s167 = scalar_select %p166, %s17, 2
        %s168 = smul.addr %s167, 32
        %s169 = smul.addr %s168, 8
        %s170 = scalar_lea.vmem %s1, %s169
      $region24: #{tpu_custom_call.1} parent=15 // pred_fallthru
        _
    $region16: #{tpu_custom_call.1} parent=5 // pred_fallthru
      _
    %p171 = scmp.le.s32.totalorder 1, %s10
    %p172 = scmp.lt.s32.totalorder %s10, 4
    %p173 = pnand %p171, %p172
    %p174 = pneg %p173
    // Predicated region
    $region25: #{tpu_custom_call.1} parent=5 // pred_check
      _
    $region26: #{tpu_custom_call.1} parent=5 // pred_check_branch
      %176 = sbr.rel (%p173) target = $region28
    $region27: #{tpu_custom_call.1} parent=5 // pred_region
      %s177 = ssub.s32 %s10, 1
      %p178 = scmp.lt.s32.totalorder %s19, 2
      %s179 = scalar_select %p178, %s19, 2
      %p180 = scmp.lt.s32.totalorder %s20, 0
      %s181 = scalar_select %p180, %s20, 0
      %s182 = smul.addr %s181, 2
      %s183 = smul.addr %s179, 2
      %s184 = sadd.s32 %s182, %s183
      %s185 = smul.addr %s184, 8
      %s186 = scalar_lea.vmem %s0, %s185
      %p187 = pneg %p50
      %p188 = pneg %p47
      %p189 = scmp.lt.s32.totalorder %s19, 2
      %s190 = scalar_select %p189, %s19, 2
      %s191 = smul.addr %s190, 32
      %s192 = smul.addr %s191, 8
      %s193 = scalar_lea.vmem %s1, %s192
      %p194 = pneg %p76
      %p195 = pneg %p73
      %p196 = pneg %p104
      %p197 = pneg %p101
      %p198 = scmp.lt.s32.totalorder %s19, 2
      %s199 = scalar_select %p198, %s19, 2
      %p200 = scmp.lt.s32.totalorder %s20, 0
      %s201 = scalar_select %p200, %s20, 0
      %s202 = sadd.s32 %s201, %s199
      %s203 = smul.addr %s202, 8
      %s204 = scalar_lea.vmem %s2, %s203
      %p205 = pneg %p132
      %p206 = pneg %p129
      %p207 = scmp.lt.s32.totalorder %s19, 2
      %s208 = scalar_select %p207, %s19, 2
      %p209 = scmp.lt.s32.totalorder %s20, 0
      %s210 = scalar_select %p209, %s20, 0
      %s211 = sadd.s32 %s210, %s208
      %s212 = smul.addr %s211, 8
      %s213 = scalar_lea.vmem %s3, %s212
      %p214 = scmp.lt.s32.totalorder %s19, 2
      %s215 = scalar_select %p214, %s19, 2
      %p216 = scmp.lt.s32.totalorder %s20, 0
      %s217 = scalar_select %p216, %s20, 0
      %s218 = smul.addr %s217, 2
      %s219 = smul.addr %s215, 2
      %s220 = sadd.s32 %s218, %s219
      %s221 = smul.addr %s220, 8
      %s222 = scalar_lea.vmem %s0, %s221
      %p223 = scmp.lt.s32.totalorder %s19, 2
      %s224 = scalar_select %p223, %s19, 2
      %s225 = smul.addr %s224, 32
      %s226 = smul.addr %s225, 8
      %s227 = scalar_lea.vmem %s1, %s226
      %p228 = scmp.lt.s32.totalorder %s19, 2
      %s229 = scalar_select %p228, %s19, 2
      %p230 = scmp.lt.s32.totalorder %s20, 0
      %s231 = scalar_select %p230, %s20, 0
      %s232 = sadd.s32 %s231, %s229
      %s233 = smul.addr %s232, 8
      %s234 = scalar_lea.vmem %s2, %s233
      %p235 = scmp.lt.s32.totalorder %s19, 2
      %s236 = scalar_select %p235, %s19, 2
      %p237 = scmp.lt.s32.totalorder %s20, 0
      %s238 = scalar_select %p237, %s20, 0
      %s239 = sadd.s32 %s238, %s236
      %s240 = smul.addr %s239, 8
      %s241 = scalar_lea.vmem %s3, %s240
      %v242 = vld [vmem:[%s222] sm:$0xff]
      %v243 = vld [vmem:[%s222 + $0x8] sm:$0xff]
      %v244 = vmul.f32 %v242, 100.0
      %v245 = vmul.f32 %v243, 100.0
      %v246 = vmax.f32 %v244, %v245
      %247 = vmax.xlane.f32.xlu0 %v246
      %v248 = vpop.xlane.xlu0 %247
      %v249 = vsub.f32 %v244, %v248
      %v250 = vsub.f32 %v245, %v248
      %v251 = vmul.f32 %v249, 1.442695
      %v252 = vpow.pop %v251
      %v253 = vmul.f32 %v250, 1.442695
      %v254 = vpow.pop %v253
      %v255 = vadd.f32 %v252, %v254
      %256 = vadd.xlane.f32.xlu0 %v255
      %v257 = vpop.xlane.xlu0 %256
      %v258 = vrcp.pop %v257
      %vm259 = vcmask 7168
      %260 = vst.msk [vmem:[%s241] sm:$0xff] %vm259, %v258
      %v261 = vld [vmem:[%s227] sm:$0xff]
      %v262 = vld [vmem:[%s227 + $0x8] sm:$0xff]
      %v263 = vld [vmem:[%s227 + $0x10] sm:$0xff]
      %v264 = vld [vmem:[%s227 + $0x18] sm:$0xff]
      %v265 = vld [vmem:[%s227 + $0x20] sm:$0xff]
      %v266 = vld [vmem:[%s227 + $0x28] sm:$0xff]
      %v267 = vld [vmem:[%s227 + $0x30] sm:$0xff]
      %v268 = vld [vmem:[%s227 + $0x38] sm:$0xff]
      %v269 = vld [vmem:[%s227 + $0x40] sm:$0xff]
      %v270 = vld [vmem:[%s227 + $0x48] sm:$0xff]
      %v271 = vld [vmem:[%s227 + $0x50] sm:$0xff]
      %v272 = vld [vmem:[%s227 + $0x58] sm:$0xff]
      %v273 = vld [vmem:[%s227 + $0x60] sm:$0xff]
      %v274 = vld [vmem:[%s227 + $0x68] sm:$0xff]
      %v275 = vld [vmem:[%s227 + $0x70] sm:$0xff]
      %v276 = vld [vmem:[%s227 + $0x78] sm:$0xff]
      %v277 = vld [vmem:[%s227 + $0x80] sm:$0xff]
      %v278 = vld [vmem:[%s227 + $0x88] sm:$0xff]
      %v279 = vld [vmem:[%s227 + $0x90] sm:$0xff]
      %v280 = vld [vmem:[%s227 + $0x98] sm:$0xff]
      %v281 = vld [vmem:[%s227 + $0xa0] sm:$0xff]
      %v282 = vld [vmem:[%s227 + $0xa8] sm:$0xff]
      %v283 = vld [vmem:[%s227 + $0xb0] sm:$0xff]
      %v284 = vld [vmem:[%s227 + $0xb8] sm:$0xff]
      %v285 = vld [vmem:[%s227 + $0xc0] sm:$0xff]
      %v286 = vld [vmem:[%s227 + $0xc8] sm:$0xff]
      %v287 = vld [vmem:[%s227 + $0xd0] sm:$0xff]
      %v288 = vld [vmem:[%s227 + $0xd8] sm:$0xff]
      %v289 = vld [vmem:[%s227 + $0xe0] sm:$0xff]
      %v290 = vld [vmem:[%s227 + $0xe8] sm:$0xff]
      %v291 = vld [vmem:[%s227 + $0xf0] sm:$0xff]
      %v292 = vld [vmem:[%s227 + $0xf8] sm:$0xff]
      %293 = vmatprep.subr.mxu0 0.0
      %294 = vmatpush1.msra.mxu0 %v276
      %295 = vmatprep.subr.mxu0 0.0
      %296 = vmatpush1.msra.mxu0 %v275
      %297 = vmatprep.subr.mxu0 0.0
      %298 = vmatpush1.msra.mxu0 %v274
      %299 = vmatprep.subr.mxu0 0.0
      %300 = vmatpush1.msra.mxu0 %v273
      %301 = vmatprep.subr.mxu0 0.0
      %302 = vmatpush1.msra.mxu0 %v272
      %303 = vmatprep.subr.mxu0 0.0
      %304 = vmatpush1.msra.mxu0 %v271
      %305 = vmatprep.subr.mxu0 0.0
      %306 = vmatpush1.msra.mxu0 %v270
      %307 = vmatprep.subr.mxu0 0.0
      %308 = vmatpush1.msra.mxu0 %v269
      %309 = vmatprep.subr.mxu0 0.0
      %310 = vmatpush1.msra.mxu0 %v268
      %311 = vmatprep.subr.mxu0 0.0
      %312 = vmatpush1.msra.mxu0 %v267
      %313 = vmatprep.subr.mxu0 0.0
      %314 = vmatpush1.msra.mxu0 %v266
      %315 = vmatprep.subr.mxu0 0.0
      %316 = vmatpush1.msra.mxu0 %v265
      %317 = vmatprep.subr.mxu0 0.0
      %318 = vmatpush1.msra.mxu0 %v264
      %319 = vmatprep.subr.mxu0 0.0
      %320 = vmatpush1.msra.mxu0 %v263
      %321 = vmatprep.subr.mxu0 0.0
      %322 = vmatpush1.msra.mxu0 %v262
      %323 = vmatprep.subr.mxu0 0.0
      %324 = vmatpush1.msra.mxu0 %v261
      %325 = vmatprep.subr.mxu0 0.0
      %326 = vmatpush2.msra.mxu0 %v292
      %327 = vmatprep.subr.mxu0 0.0
      %328 = vmatpush2.msra.mxu0 %v291
      %329 = vmatprep.subr.mxu0 0.0
      %330 = vmatpush2.msra.mxu0 %v290
      %331 = vmatprep.subr.mxu0 0.0
      %332 = vmatpush2.msra.mxu0 %v289
      %333 = vmatprep.subr.mxu0 0.0
      %334 = vmatpush2.msra.mxu0 %v288
      %335 = vmatprep.subr.mxu0 0.0
      %336 = vmatpush2.msra.mxu0 %v287
      %337 = vmatprep.subr.mxu0 0.0
      %338 = vmatpush2.msra.mxu0 %v286
      %339 = vmatprep.subr.mxu0 0.0
      %340 = vmatpush2.msra.mxu0 %v285
      %341 = vmatprep.subr.mxu0 0.0
      %342 = vmatpush2.msra.mxu0 %v284
      %343 = vmatprep.subr.mxu0 0.0
      %344 = vmatpush2.msra.mxu0 %v283
      %345 = vmatprep.subr.mxu0 0.0
      %346 = vmatpush2.msra.mxu0 %v282
      %347 = vmatprep.subr.mxu0 0.0
      %348 = vmatpush2.msra.mxu0 %v281
      %349 = vmatprep.subr.mxu0 0.0
      %350 = vmatpush2.msra.mxu0 %v280
      %351 = vmatprep.subr.mxu0 0.0
      %352 = vmatpush2.msra.mxu0 %v279
      %353 = vmatprep.subr.mxu0 0.0
      %354 = vmatpush2.msra.mxu0 %v278
      %355 = vmatprep.subr.mxu0 0.0
      %356 = vmatpush2.msra.mxu0 %v277
      %357 = vmatprep.mubr.f32.mxu0 %v254
      %358 = vmatmul.mubr.f32.gmra.mxu0 %v252
      %v359 = vpop.f32.mrf.mxu0
      %v360 = vadd.f32 0.0, %v359
      %v361 = vpop.f32.mrf.mxu0
      %362 = vdwg.mxu0
      %v363 = vmul.f32 %v360, %v258
      %vm364 = vcmask 15360
      %365 = vst.msk [vmem:[%s234] sm:$0xff] %vm364, %v363
      %p366 = scmp.lt.s32.totalorder %s19, 2
      %s367 = scalar_select %p366, %s19, 2
      %p368 = scmp.lt.s32.totalorder %s20, 0
      %s369 = scalar_select %p368, %s20, 0
      %s370 = sadd.s32 %s369, %s367
      %s371 = smul.addr %s370, 8
      %s372 = scalar_lea.vmem %s2, %s371
      %p373 = scmp.lt.s32.totalorder %s19, 2
      %s374 = scalar_select %p373, %s19, 2
      %p375 = scmp.lt.s32.totalorder %s20, 0
      %s376 = scalar_select %p375, %s20, 0
      %s377 = sadd.s32 %s376, %s374
      %s378 = smul.addr %s377, 8
      %s379 = scalar_lea.vmem %s3, %s378
      // Predicated region
      $region29: #{tpu_custom_call.1} parent=27 // pred_check
        %p380 = pneg %p101
      $region30: #{tpu_custom_call.1} parent=27 // pred_check_branch
        %382 = sbr.rel (%p380) target = $region32
      $region31: #{tpu_custom_call.1} parent=27 // pred_region
        _
      $region32: #{tpu_custom_call.1} parent=27 // pred_fallthru
        _
      // Predicated region
      $region33: #{tpu_custom_call.1} parent=27 // pred_check
        %p383 = pneg %p129
      $region34: #{tpu_custom_call.1} parent=27 // pred_check_branch
        %385 = sbr.rel (%p383) target = $region36
      $region35: #{tpu_custom_call.1} parent=27 // pred_region
        _
      $region36: #{tpu_custom_call.1} parent=27 // pred_fallthru
        _
    $region28: #{tpu_custom_call.1} parent=5 // pred_fallthru
      _
    %p386 = scmp.le.s32.totalorder 2, %s10
    // Predicated region
    $region37: #{tpu_custom_call.1} parent=5 // pred_check
      %p387 = pneg %p386
    $region38: #{tpu_custom_call.1} parent=5 // pred_check_branch
      %389 = sbr.rel (%p387) target = $region40
    $region39: #{tpu_custom_call.1} parent=5 // pred_region
      %s390 = ssub.s32 %s10, 2
      // Predicated region
      $region41: #{tpu_custom_call.1} parent=39 // pred_check
        %p391 = pneg %p107
      $region42: #{tpu_custom_call.1} parent=39 // pred_check_branch
        %393 = sbr.rel (%p391) target = $region44
      $region43: #{tpu_custom_call.1} parent=39 // pred_region
        %p394 = scmp.lt.s32.totalorder %s21, 2
        %s395 = scalar_select %p394, %s21, 2
        %p396 = scmp.lt.s32.totalorder %s22, 0
        %s397 = scalar_select %p396, %s22, 0
        %s398 = sadd.s32 %s397, %s395
        %s399 = smul.addr %s398, 8
        %s400 = scalar_lea.vmem %s2, %s399
      $region44: #{tpu_custom_call.1} parent=39 // pred_fallthru
        _
      // Predicated region
      $region45: #{tpu_custom_call.1} parent=39 // pred_check
        %p401 = pneg %p135
      $region46: #{tpu_custom_call.1} parent=39 // pred_check_branch
        %403 = sbr.rel (%p401) target = $region48
      $region47: #{tpu_custom_call.1} parent=39 // pred_region
        %p404 = scmp.lt.s32.totalorder %s21, 2
        %s405 = scalar_select %p404, %s21, 2
        %p406 = scmp.lt.s32.totalorder %s22, 0
        %s407 = scalar_select %p406, %s22, 0
        %s408 = sadd.s32 %s407, %s405
        %s409 = smul.addr %s408, 8
        %s410 = scalar_lea.vmem %s3, %s409
      $region48: #{tpu_custom_call.1} parent=39 // pred_fallthru
        _
    $region40: #{tpu_custom_call.1} parent=5 // pred_fallthru
      _
  $region6: #{tpu_custom_call.1} parent=0 // loop_footer
    %s14 = sadd.s32 1, %s10
  $region7: #{tpu_custom_call.1} parent=0 // loop_footer_branch
    %9 = sbr.rel target = $region3
  $region8: #{tpu_custom_call.1} parent=0 // loop_exit
    _

</llo_original>
